<compile_context>
chip_gen: v7x
topology: tpu7x:2x2x1
jax: 0.10.0
libtpu: 0.0.40
codegen_flags: <defaults>
</compile_context>

<pallas_src>
import functools

import jax
import jax.numpy as jnp
from jax.experimental import pallas as pl
from jax.experimental.pallas import tpu as pltpu


def _round_up(x, m):
    return (x + m - 1) // m * m


def char_cnn_kernel(x_ref, w_ref, b_ref, mask_ref, out_ref, *, lc):
    """One fused im2col matmul + masked time-max + bias for a tile of words.

    x_ref:    (tile_n*lc, k_max*E)  im2col LHS (bf16 or f32)
    w_ref:    (k_max*E, out_total)  block-diagonal fused conv weights
    b_ref:    (1, out_total)        fused bias row
    mask_ref: (lc, out_total)       additive time-validity mask (0 valid / -inf invalid)
    out_ref:  (tile_n, out_total)   f32 output tile
    """
    tn = out_ref.shape[0]
    out_total = out_ref.shape[1]

    # Single wide MXU matmul for all convs and all taps, f32 accumulation.
    y = jnp.dot(x_ref[...], w_ref[...], preferred_element_type=jnp.float32)
    # (tile_n*lc, O) -> (tile_n, lc, O); lc is a multiple of 8 here so this reshape is
    # tile-aligned.  Mask invalid time positions per conv, then one max over time.
    y = y.reshape(tn, lc, out_total) + mask_ref[...]
    m = jnp.max(y, axis=1)                                  # (tile_n, out_total)
    out_ref[...] = (m + b_ref[...]).astype(out_ref.dtype)   # bias after max (equivalent)


def character_cnn_forward(x, params, kernel_sizes=(1, 3, 5), tile_n=256,
                          use_bf16=True):
    """x: (B, Lw, Lc, E) float32.  params: list of (w, b) with w in PyTorch Conv1d
    layout (O, E, k), b (O,).  Returns (B*Lw, sum(O)) float32 matching the module."""
    b, lw, lc, e = x.shape
    n = b * lw
    channels = [w.shape[0] for (w, _) in params]
    out_real = sum(channels)                      # 300
    out_total = _round_up(out_real, 128)          # 384: contiguous, lane-aligned output
    k_max = max(kernel_sizes)

    # --- Fused block-diagonal weights, bias row, and time-validity mask (built once) --
    w_fused = jnp.zeros((k_max * e, out_total), jnp.float32)
    b_fused = jnp.zeros((1, out_total), jnp.float32)
    mask = jnp.zeros((lc, out_total), jnp.float32)
    off = 0
    for (w, bias), k in zip(params, kernel_sizes):
        o = w.shape[0]
        for j in range(k):
            w_fused = w_fused.at[j * e:(j + 1) * e, off:off + o].set(
                jnp.transpose(w[:, :, j]))        # (E, O) per tap
        b_fused = b_fused.at[0, off:off + o].set(bias)
        lout = lc - k + 1                         # valid conv output length
        if lout < lc:
            mask = mask.at[lout:, off:off + o].set(-jnp.inf)
        off += o

    # --- Wrapper-side im2col: (N, Lc, E) -> (N*Lc, k_max*E) -----------------------
    xf = x.reshape(n, lc, e)
    xp = jnp.pad(xf, ((0, 0), (0, k_max - 1), (0, 0)))
    lhs = jnp.concatenate([xp[:, j:j + lc, :] for j in range(k_max)], axis=-1)
    lhs2d = lhs.reshape(n * lc, k_max * e)

    # --- Tiling over words: tile_n multiple of 8; grid >= 2 (and even) for v7x ----
    tile_n = max(8, _round_up(min(int(tile_n), _round_up(n, 8)), 8))
    while tile_n > 8 and _round_up(n, tile_n) // tile_n < 2:
        tile_n = max(8, _round_up(tile_n // 2, 8))
    num_tiles = _round_up(n, tile_n) // tile_n
    if num_tiles > 1 and num_tiles % 2 == 1:
        num_tiles += 1                            # keep grid even for v7x's 2 TCs
    n_pad = num_tiles * tile_n
    if n_pad != n:
        lhs2d = jnp.pad(lhs2d, ((0, (n_pad - n) * lc), (0, 0)))

    compute_dtype = jnp.bfloat16 if use_bf16 else jnp.float32
    lhs2d = lhs2d.astype(compute_dtype)
    w_in = w_fused.astype(compute_dtype)

    kernel = functools.partial(char_cnn_kernel, lc=lc)

    out_pad = pl.pallas_call(
        kernel,
        out_shape=jax.ShapeDtypeStruct((n_pad, out_total), jnp.float32),
        grid_spec=pltpu.PrefetchScalarGridSpec(
            num_scalar_prefetch=0,
            grid=(num_tiles,),
            in_specs=[
                pl.BlockSpec((tile_n * lc, k_max * e), lambda i: (i, 0)),
                pl.BlockSpec((k_max * e, out_total), lambda i: (0, 0)),
                pl.BlockSpec((1, out_total), lambda i: (0, 0)),
                pl.BlockSpec((lc, out_total), lambda i: (0, 0)),
            ],
            out_specs=pl.BlockSpec((tile_n, out_total), lambda i: (i, 0)),
        ),
        compiler_params=pltpu.CompilerParams(
            dimension_semantics=("parallel",)),
    )(lhs2d, w_in, b_fused, mask)

    # Real channels are contiguous: one slice, no per-conv slice+concat.
    return out_pad[:n, :out_real]


def init_params(key, embedding_dim, kernel_sizes=(1, 3, 5), conv_channels=(50, 100, 150)):
    """Synthetic init: weights ~ N(0, 0.02) (as in __init_weights), small random bias.
    Weights kept in PyTorch Conv1d layout (O, E, k)."""
    params = []
    keys = jax.random.split(key, 2 * len(kernel_sizes))
    for idx, (k, o) in enumerate(zip(kernel_sizes, conv_channels)):
        w = 0.02 * jax.random.normal(keys[2 * idx], (o, embedding_dim, k), dtype=jnp.float32)
        bias = 0.02 * jax.random.normal(keys[2 * idx + 1], (o,), dtype=jnp.float32)
        params.append((w, bias))
    return params


def reference_forward(x, params, kernel_sizes=(1, 3, 5)):
    """Pure-JAX reference matching the PyTorch module exactly."""
    b, lw, lc, e = x.shape
    xf = x.reshape(b * lw, lc, e).astype(jnp.float32)
    outs = []
    for (w, bias), k in zip(params, kernel_sizes):
        lout = lc - k + 1
        o = w.shape[0]
        conv = jnp.zeros((b * lw, lout, o), jnp.float32)
        for j in range(k):
            conv = conv + jnp.einsum("nle,oe->nlo", xf[:, j:j + lout, :], w[:, :, j])
        conv = conv + bias[None, None, :]
        outs.append(jnp.max(conv, axis=1))
    return jnp.concatenate(outs, axis=1)


if __name__ == "__main__":
    # Small shapes consistent with the module's forward: (B, Lw, Lc, E).
    B, Lw, Lc, E = 2, 8, 16, 32
    key = jax.random.PRNGKey(0)
    kx, kp = jax.random.split(key)
    x = jax.random.normal(kx, (B, Lw, Lc, E), dtype=jnp.float32)

    params = init_params(kp, embedding_dim=E)
    ref = jax.block_until_ready(reference_forward(x, params))

    # f32 path: tight tolerance.
    out_f32 = jax.block_until_ready(character_cnn_forward(x, params, use_bf16=False))
    assert out_f32.shape == (B * Lw, 300), out_f32.shape
    err32 = float(jnp.max(jnp.abs(out_f32 - ref)))
    assert jnp.allclose(out_f32, ref, atol=1e-4, rtol=1e-4), err32

    # bf16 path (default): relaxed tolerance (bf16 inputs, f32 accumulation/epilogue).
    out_bf16 = jax.block_until_ready(character_cnn_forward(x, params))
    assert out_bf16.shape == (B * Lw, 300), out_bf16.shape
    err16 = float(jnp.max(jnp.abs(out_bf16 - ref)))
    assert jnp.allclose(out_bf16, ref, atol=2e-2, rtol=2e-2), err16

    print("KERNEL_OK")
</pallas_src>

<mosaic_0001>
module attributes {stable_mosaic.version = 11 : i64} {
  func.func @char_cnn_kernel(%arg0: i32, %arg1: memref<128x160xf32, #tpu.memory_space<vmem>>, %arg2: memref<160x384xf32, #tpu.memory_space<vmem>>, %arg3: memref<1x384xf32, #tpu.memory_space<vmem>>, %arg4: memref<16x384xf32, #tpu.memory_space<vmem>>, %arg5: memref<8x384xf32, #tpu.memory_space<vmem>>) attributes {dimension_semantics = [#tpu.dimension_semantics<parallel>], iteration_bounds = array<i64: 2>, scalar_prefetch = 0 : i64, scratch_operands = 0 : i64, tpu.core_type = #tpu.core_type<tc>, window_params = [{transform_indices = @transform_0, window_bounds = array<i64: 128, 160>}, {pipeline_mode = #tpu.pipeline_mode<synchronous>, transform_indices = @transform_1, window_bounds = array<i64: 160, 384>}, {pipeline_mode = #tpu.pipeline_mode<synchronous>, transform_indices = @transform_2, window_bounds = array<i64: 1, 384>}, {pipeline_mode = #tpu.pipeline_mode<synchronous>, transform_indices = @transform_3, window_bounds = array<i64: 16, 384>}, {transform_indices = @transform_4, window_bounds = array<i64: 8, 384>}]} {
    %c0 = arith.constant 0 : index
    %c0_0 = arith.constant 0 : index
    %0 = vector.load %arg1[%c0, %c0_0] : memref<128x160xf32, #tpu.memory_space<vmem>>, vector<128x160xf32>
    %c0_1 = arith.constant 0 : index
    %c0_2 = arith.constant 0 : index
    %1 = vector.load %arg2[%c0_1, %c0_2] : memref<160x384xf32, #tpu.memory_space<vmem>>, vector<160x384xf32>
    %cst = arith.constant dense<0.000000e+00> : vector<128x384xf32>
    %2 = tpu.matmul %0, %1, %cst {dimension_numbers = #tpu.dot_dimension_numbers<[1], [0], [0], [1], [0, 0, 1, 1], [], []>} : vector<128x160xf32>, vector<160x384xf32>, vector<128x384xf32> -> vector<128x384xf32>
    %3 = vector.shape_cast %2 : vector<128x384xf32> to vector<8x16x384xf32>
    %c0_3 = arith.constant 0 : index
    %c0_4 = arith.constant 0 : index
    %4 = vector.load %arg4[%c0_3, %c0_4] : memref<16x384xf32, #tpu.memory_space<vmem>>, vector<16x384xf32>
    %5 = vector.shape_cast %4 : vector<16x384xf32> to vector<1x16x384xf32>
    %6 = vector.broadcast %5 : vector<1x16x384xf32> to vector<8x16x384xf32>
    %7 = arith.addf %3, %6 : vector<8x16x384xf32>
    %cst_5 = arith.constant dense<0xFF800000> : vector<8x384xf32>
    %8 = vector.multi_reduction <maximumf>, %7, %cst_5 [1] : vector<8x16x384xf32> to vector<8x384xf32>
    %c0_6 = arith.constant 0 : index
    %c0_7 = arith.constant 0 : index
    %9 = vector.load %arg3[%c0_6, %c0_7] : memref<1x384xf32, #tpu.memory_space<vmem>>, vector<1x384xf32>
    %10 = vector.broadcast %9 : vector<1x384xf32> to vector<8x384xf32>
    %11 = arith.addf %8, %10 : vector<8x384xf32>
    %c0_8 = arith.constant 0 : index
    %c0_9 = arith.constant 0 : index
    %12 = vector.load %arg5[%c0_8, %c0_9] : memref<8x384xf32, #tpu.memory_space<vmem>>, vector<8x384xf32>
    tpu.vector_store %arg5[%c0_8, %c0_9], %11 {strides = array<i32>} : memref<8x384xf32, #tpu.memory_space<vmem>>, vector<8x384xf32>,
    return
  }
  func.func @transform_0(%arg0: i32) -> (i32, i32) {
    %c0_i32 = arith.constant 0 : i32
    %c0_i32_0 = arith.constant 0 : i32
    return %arg0, %c0_i32 : i32, i32
  }
  func.func @transform_1(%arg0: i32) -> (i32, i32) {
    %c0_i32 = arith.constant 0 : i32
    %c0_i32_0 = arith.constant 0 : i32
    %c0_i32_1 = arith.constant 0 : i32
    return %c0_i32, %c0_i32_0 : i32, i32
  }
  func.func @transform_2(%arg0: i32) -> (i32, i32) {
    %c0_i32 = arith.constant 0 : i32
    %c0_i32_0 = arith.constant 0 : i32
    %c0_i32_1 = arith.constant 0 : i32
    return %c0_i32, %c0_i32_0 : i32, i32
  }
  func.func @transform_3(%arg0: i32) -> (i32, i32) {
    %c0_i32 = arith.constant 0 : i32
    %c0_i32_0 = arith.constant 0 : i32
    %c0_i32_1 = arith.constant 0 : i32
    return %c0_i32, %c0_i32_0 : i32, i32
  }
  func.func @transform_4(%arg0: i32) -> (i32, i32) {
    %c0_i32 = arith.constant 0 : i32
    %c0_i32_0 = arith.constant 0 : i32
    return %arg0, %c0_i32 : i32, i32
  }
}

</mosaic_0001>

<llo_original>
// kernel: tpu_custom_call.1
$region0: #{tpu_custom_call.1}
  #allocation0 [shape = 'u32[]', space=smem, size = 0x4, offset = 0x4, fixed_abs, tag = 'smem constant byte address 0x4 - core index']
  #allocation1 [shape = 'u32[144,128]{1,0:T(1,128)}', space=vmem, size = 0x12000, scoped, tag = 'internal scratch']
  %s0 = inlined_call_operand.vmem [shape: f32[256,160], index: 0, kind: input, shape index: {}]
  %s1 = inlined_call_operand.vmem [shape: f32[160,384], index: 1, kind: input, shape index: {}]
  %s2 = inlined_call_operand.vmem [shape: f32[1,384], index: 2, kind: input, shape index: {}]
  %s3 = inlined_call_operand.vmem [shape: f32[16,384], index: 3, kind: input, shape index: {}]
  %s4 = inlined_call_operand.hbm [shape: f32[16,384], index: 4, kind: output, shape index: {}]
  %s5 = sld [smem:[#allocation0]]
  $region49: #{tpu_custom_call.1} parent=0
    _
  %s7 = ssub.s32 1, %s5
  %s8 = scalar_select 0, %s7, %s5
  $region1: #{tpu_custom_call.1} parent=0
    #allocation2 [shape = 'u8[24576]{0}', space=vmem, size = 0x6000, scoped, tag = 'output window, operand 0']
    #allocation3 [shape = 's32[2]{0}', space=sflag, size = 0x8, scoped, tag = 'scoped memory for tpu_custom_call.1']
    %9 = vsyncpa [#allocation3], 0
    %s10 = scalar_lea.sflag [#allocation3], 1
    %11 = vsyncpa %s10, 0
    loop: start=0, step=1, limit=4
    $region2: #{tpu_custom_call.1} parent=1 // loop_pre_header
      _
    $region3: #{tpu_custom_call.1} parent=1 // loop_header
      %s13 = sphi 0, %s17
      %p14 = scmp.ge.s32.totalorder %s13, 4
      %s23 = sphi 0, %s25
      %s26 = sphi 0, %s23
      %s27 = sphi 0, %s26
      %s43 = sphi 0, %s27
      %s47 = sphi 0, %s47
      %s49 = sphi 0, %s47
      %s50 = sphi 0, %s49
      %s64 = sphi 0, %s50
      %s68 = sphi 0, %s68
      %s70 = sphi 0, %s68
      %s71 = sphi 0, %s70
      %s85 = sphi 0, %s71
      %s89 = sphi 0, %s89
      %s91 = sphi 0, %s89
      %s92 = sphi 0, %s91
      %s106 = sphi 0, %s92
      %s112 = sphi 0, %s114
      %s115 = sphi 0, %s112
      %s116 = sphi 0, %s115
      %s132 = sphi 0, %s116
    $region4: #{tpu_custom_call.1} parent=1 // loop_header_branch
      %16 = sbr.rel (%p14) target = $region8
    $region5: #{tpu_custom_call.1} parent=1 // loop_body
      %s18 = ssub.s32 %s13, 1
      %s19 = ssub.s32 %s13, 2
      %s20 = sadd.s32 %s13, 1
      %s21 = ssub.s32 %s13, %s20
      %p22 = scmp.eq.s32.totalorder %s21, 0
      %s24 = sadd.s32 %s23, 1
      %s25 = scalar_select %p22, %s23, %s24
      %p28 = pneg %p22
      %p29 = scmp.eq.s32.totalorder %s13, 1
      %p30 = por %p28, %p29
      %p31 = scmp.ne.s32.totalorder %s23, %s26
      %p32 = scmp.eq.s32.totalorder %s13, 0
      %p33 = por %p31, %p32
      %p34 = scmp.ne.s32.totalorder %s23, %s26
      %p35 = scmp.eq.s32.totalorder %s18, 1
      %p36 = por %p34, %p35
      %p37 = scmp.ne.s32.totalorder %s26, %s27
      %p38 = scmp.eq.s32.totalorder %s18, 0
      %p39 = por %p37, %p38
      %p40 = scmp.ne.s32.totalorder %s26, %s27
      %p41 = scmp.eq.s32.totalorder %s19, 1
      %p42 = por %p40, %p41
      %p44 = scmp.ne.s32.totalorder %s27, %s43
      %p45 = scmp.eq.s32.totalorder %s19, 0
      %p46 = por %p44, %p45
      %s48 = sadd.s32 %s47, 1
      %p51 = scmp.eq.s32.totalorder %s13, 1
      %p52 = scmp.ne.s32.totalorder %s47, %s49
      %p53 = scmp.eq.s32.totalorder %s13, 0
      %p54 = por %p52, %p53
      %p55 = scmp.ne.s32.totalorder %s47, %s49
      %p56 = scmp.eq.s32.totalorder %s18, 1
      %p57 = por %p55, %p56
      %p58 = scmp.ne.s32.totalorder %s49, %s50
      %p59 = scmp.eq.s32.totalorder %s18, 0
      %p60 = por %p58, %p59
      %p61 = scmp.ne.s32.totalorder %s49, %s50
      %p62 = scmp.eq.s32.totalorder %s19, 1
      %p63 = por %p61, %p62
      %p65 = scmp.ne.s32.totalorder %s50, %s64
      %p66 = scmp.eq.s32.totalorder %s19, 0
      %p67 = por %p65, %p66
      %s69 = sadd.s32 %s68, 1
      %p72 = scmp.eq.s32.totalorder %s13, 1
      %p73 = scmp.ne.s32.totalorder %s68, %s70
      %p74 = scmp.eq.s32.totalorder %s13, 0
      %p75 = por %p73, %p74
      %p76 = scmp.ne.s32.totalorder %s68, %s70
      %p77 = scmp.eq.s32.totalorder %s18, 1
      %p78 = por %p76, %p77
      %p79 = scmp.ne.s32.totalorder %s70, %s71
      %p80 = scmp.eq.s32.totalorder %s18, 0
      %p81 = por %p79, %p80
      %p82 = scmp.ne.s32.totalorder %s70, %s71
      %p83 = scmp.eq.s32.totalorder %s19, 1
      %p84 = por %p82, %p83
      %p86 = scmp.ne.s32.totalorder %s71, %s85
      %p87 = scmp.eq.s32.totalorder %s19, 0
      %p88 = por %p86, %p87
      %s90 = sadd.s32 %s89, 1
      %p93 = scmp.eq.s32.totalorder %s13, 1
      %p94 = scmp.ne.s32.totalorder %s89, %s91
      %p95 = scmp.eq.s32.totalorder %s13, 0
      %p96 = por %p94, %p95
      %p97 = scmp.ne.s32.totalorder %s89, %s91
      %p98 = scmp.eq.s32.totalorder %s18, 1
      %p99 = por %p97, %p98
      %p100 = scmp.ne.s32.totalorder %s91, %s92
      %p101 = scmp.eq.s32.totalorder %s18, 0
      %p102 = por %p100, %p101
      %p103 = scmp.ne.s32.totalorder %s91, %s92
      %p104 = scmp.eq.s32.totalorder %s19, 1
      %p105 = por %p103, %p104
      %p107 = scmp.ne.s32.totalorder %s92, %s106
      %p108 = scmp.eq.s32.totalorder %s19, 0
      %p109 = por %p107, %p108
      %s110 = ssub.s32 %s13, %s20
      %p111 = scmp.eq.s32.totalorder %s110, 0
      %s113 = sadd.s32 %s112, 1
      %s114 = scalar_select %p111, %s112, %s113
      %p117 = pneg %p111
      %p118 = scmp.eq.s32.totalorder %s13, 1
      %p119 = por %p117, %p118
      %p120 = scmp.ne.s32.totalorder %s112, %s115
      %p121 = scmp.eq.s32.totalorder %s13, 0
      %p122 = por %p120, %p121
      %p123 = scmp.ne.s32.totalorder %s112, %s115
      %p124 = scmp.eq.s32.totalorder %s18, 1
      %p125 = por %p123, %p124
      %p126 = scmp.ne.s32.totalorder %s115, %s116
      %p127 = scmp.eq.s32.totalorder %s18, 0
      %p128 = por %p126, %p127
      %p129 = scmp.ne.s32.totalorder %s115, %s116
      %p130 = scmp.eq.s32.totalorder %s19, 1
      %p131 = por %p129, %p130
      %p133 = scmp.ne.s32.totalorder %s116, %s132
      %p134 = scmp.eq.s32.totalorder %s19, 0
      %p135 = por %p133, %p134
      %p136 = scmp.le.s32.totalorder 1, %s13
      %p137 = scmp.lt.s32.totalorder %s13, 3
      %p138 = pnand %p136, %p137
      %p139 = pneg %p138
      // Predicated region
      $region9: #{tpu_custom_call.1} parent=5 // pred_check
        _
      $region10: #{tpu_custom_call.1} parent=5 // pred_check_branch
        %141 = sbr.rel (%p138) target = $region12
      $region11: #{tpu_custom_call.1} parent=5 // pred_region
        %s142 = ssub.s32 %s13, 1
        // Predicated region
        $region13: #{tpu_custom_call.1} parent=11 // pred_check
          %p143 = pneg %p60
        $region14: #{tpu_custom_call.1} parent=11 // pred_check_branch
          %145 = sbr.rel (%p143) target = $region16
        $region15: #{tpu_custom_call.1} parent=11 // pred_region
          _
        $region16: #{tpu_custom_call.1} parent=11 // pred_fallthru
          _
        // Predicated region
        $region17: #{tpu_custom_call.1} parent=11 // pred_check
          %p146 = pneg %p81
        $region18: #{tpu_custom_call.1} parent=11 // pred_check_branch
          %148 = sbr.rel (%p146) target = $region20
        $region19: #{tpu_custom_call.1} parent=11 // pred_region
          _
        $region20: #{tpu_custom_call.1} parent=11 // pred_fallthru
          _
        // Predicated region
        $region21: #{tpu_custom_call.1} parent=11 // pred_check
          %p149 = pneg %p102
        $region22: #{tpu_custom_call.1} parent=11 // pred_check_branch
          %151 = sbr.rel (%p149) target = $region24
        $region23: #{tpu_custom_call.1} parent=11 // pred_region
          _
        $region24: #{tpu_custom_call.1} parent=11 // pred_fallthru
          _
      $region12: #{tpu_custom_call.1} parent=5 // pred_fallthru
        _
      %p152 = scmp.lt.s32.totalorder %s13, 2
      // Predicated region
      $region25: #{tpu_custom_call.1} parent=5 // pred_check
        %p153 = pneg %p152
      $region26: #{tpu_custom_call.1} parent=5 // pred_check_branch
        %155 = sbr.rel (%p153) target = $region28
      $region27: #{tpu_custom_call.1} parent=5 // pred_region
        // Predicated region
        $region29: #{tpu_custom_call.1} parent=27 // pred_check
          %p156 = pneg %p33
        $region30: #{tpu_custom_call.1} parent=27 // pred_check_branch
          %158 = sbr.rel (%p156) target = $region32
        $region31: #{tpu_custom_call.1} parent=27 // pred_region
          %s159 = smul.u32 16, %s13
          %p160 = scmp.lt.s32.totalorder %s159, 31
          %s161 = scalar_select %p160, %s159, 31
          %s162 = smul.addr %s161, 2
          %s163 = smul.addr %s162, 8
          %s164 = scalar_lea.vmem %s0, %s163
          %s165 = smul.u32 16, %s13
        $region32: #{tpu_custom_call.1} parent=27 // pred_fallthru
          _
      $region28: #{tpu_custom_call.1} parent=5 // pred_fallthru
        _
      %p166 = scmp.le.s32.totalorder 1, %s13
      %p167 = scmp.lt.s32.totalorder %s13, 3
      %p168 = pnand %p166, %p167
      %p169 = pneg %p168
      // Predicated region
      $region33: #{tpu_custom_call.1} parent=5 // pred_check
        _
      $region34: #{tpu_custom_call.1} parent=5 // pred_check_branch
        %171 = sbr.rel (%p168) target = $region36
      $region35: #{tpu_custom_call.1} parent=5 // pred_region
        %s172 = ssub.s32 %s13, 1
        %s173 = smul.u32 16, %s18
        %p174 = scmp.lt.s32.totalorder %s173, 31
        %s175 = scalar_select %p174, %s173, 31
        %s176 = smul.addr %s175, 2
        %s177 = smul.addr %s176, 8
        %s178 = scalar_lea.vmem %s0, %s177
        %p179 = pneg %p39
        %p180 = pneg %p36
        %p181 = pneg %p60
        %p182 = pneg %p57
        %p183 = pneg %p81
        %p184 = pneg %p78
        %p185 = pneg %p102
        %p186 = pneg %p99
        %p187 = pneg %p128
        %p188 = pneg %p125
        %s189 = sand.u32 %s115, 1
        %s190 = scalar_lea.sflag [#allocation3], %s189
        %s191 = sand.u32 %s115, 1
        %s192 = smul.addr %s191, 24
        %s193 = scalar_lea.vmem [#allocation2], %s192
        %s194 = smul.u32 16, %s18
        %p195 = scmp.lt.s32.totalorder %s194, 31
        %s196 = scalar_select %p195, %s194, 31
        %s197 = smul.addr %s196, 2
        %s198 = smul.addr %s197, 8
        %s199 = scalar_lea.vmem %s0, %s198
        %s200 = smul.u32 16, %s18
        %v201 = vld [vmem:[%s199] sm:$0xff]
        %v202 = vld [vmem:[%s199 + $0x8] sm:$0xff]
        %v203 = vld [vmem:[%s199 + $0x10] sm:$0xff]
        %v204 = vld [vmem:[%s199 + $0x18] sm:$0xff]
        %v205 = vld [vmem:[%s199 + $0x20] sm:$0xff]
        %v206 = vld [vmem:[%s199 + $0x28] sm:$0xff]
        %v207 = vld [vmem:[%s199 + $0x30] sm:$0xff]
        %v208 = vld [vmem:[%s199 + $0x38] sm:$0xff]
        %v209 = vld [vmem:[%s199 + $0x40] sm:$0xff]
        %v210 = vld [vmem:[%s199 + $0x48] sm:$0xff]
        %v211 = vld [vmem:[%s199 + $0x50] sm:$0xff]
        %v212 = vld [vmem:[%s199 + $0x58] sm:$0xff]
        %v213 = vld [vmem:[%s199 + $0x60] sm:$0xff]
        %v214 = vld [vmem:[%s199 + $0x68] sm:$0xff]
        %v215 = vld [vmem:[%s199 + $0x70] sm:$0xff]
        %v216 = vld [vmem:[%s199 + $0x78] sm:$0xff]
        %v217 = vld [vmem:[%s199 + $0x80] sm:$0xff]
        %v218 = vld [vmem:[%s199 + $0x88] sm:$0xff]
        %v219 = vld [vmem:[%s199 + $0x90] sm:$0xff]
        %v220 = vld [vmem:[%s199 + $0x98] sm:$0xff]
        %v221 = vld [vmem:[%s199 + $0xa0] sm:$0xff]
        %v222 = vld [vmem:[%s199 + $0xa8] sm:$0xff]
        %v223 = vld [vmem:[%s199 + $0xb0] sm:$0xff]
        %v224 = vld [vmem:[%s199 + $0xb8] sm:$0xff]
        %v225 = vld [vmem:[%s199 + $0xc0] sm:$0xff]
        %v226 = vld [vmem:[%s199 + $0xc8] sm:$0xff]
        %v227 = vld [vmem:[%s199 + $0xd0] sm:$0xff]
        %v228 = vld [vmem:[%s199 + $0xd8] sm:$0xff]
        %v229 = vld [vmem:[%s199 + $0xe0] sm:$0xff]
        %v230 = vld [vmem:[%s199 + $0xe8] sm:$0xff]
        %v231 = vld [vmem:[%s199 + $0xf0] sm:$0xff]
        %v232 = vld [vmem:[%s199 + $0xf8] sm:$0xff]
        %v233 = vld [vmem:[%s1] sm:$0xff]
        %v234 = vld [vmem:[%s1 + $0x8] sm:$0xff]
        %v235 = vld [vmem:[%s1 + $0x10] sm:$0xff]
        %v236 = vld [vmem:[%s1 + $0x18] sm:$0xff]
        %v237 = vld [vmem:[%s1 + $0x20] sm:$0xff]
        %v238 = vld [vmem:[%s1 + $0x28] sm:$0xff]
        %v239 = vld [vmem:[%s1 + $0x30] sm:$0xff]
        %v240 = vld [vmem:[%s1 + $0x38] sm:$0xff]
        %v241 = vld [vmem:[%s1 + $0x40] sm:$0xff]
        %v242 = vld [vmem:[%s1 + $0x48] sm:$0xff]
        %v243 = vld [vmem:[%s1 + $0x50] sm:$0xff]
        %v244 = vld [vmem:[%s1 + $0x58] sm:$0xff]
        %v245 = vld [vmem:[%s1 + $0x60] sm:$0xff]
        %v246 = vld [vmem:[%s1 + $0x68] sm:$0xff]
        %v247 = vld [vmem:[%s1 + $0x70] sm:$0xff]
        %v248 = vld [vmem:[%s1 + $0x78] sm:$0xff]
        %v249 = vld [vmem:[%s1 + $0x80] sm:$0xff]
        %v250 = vld [vmem:[%s1 + $0x88] sm:$0xff]
        %v251 = vld [vmem:[%s1 + $0x90] sm:$0xff]
        %v252 = vld [vmem:[%s1 + $0x98] sm:$0xff]
        %v253 = vld [vmem:[%s1 + $0xa0] sm:$0xff]
        %v254 = vld [vmem:[%s1 + $0xa8] sm:$0xff]
        %v255 = vld [vmem:[%s1 + $0xb0] sm:$0xff]
        %v256 = vld [vmem:[%s1 + $0xb8] sm:$0xff]
        %v257 = vld [vmem:[%s1 + $0xc0] sm:$0xff]
        %v258 = vld [vmem:[%s1 + $0xc8] sm:$0xff]
        %v259 = vld [vmem:[%s1 + $0xd0] sm:$0xff]
        %v260 = vld [vmem:[%s1 + $0xd8] sm:$0xff]
        %v261 = vld [vmem:[%s1 + $0xe0] sm:$0xff]
        %v262 = vld [vmem:[%s1 + $0xe8] sm:$0xff]
        %v263 = vld [vmem:[%s1 + $0xf0] sm:$0xff]
        %v264 = vld [vmem:[%s1 + $0xf8] sm:$0xff]
        %v265 = vld [vmem:[%s1 + $0x100] sm:$0xff]
        %v266 = vld [vmem:[%s1 + $0x108] sm:$0xff]
        %v267 = vld [vmem:[%s1 + $0x110] sm:$0xff]
        %v268 = vld [vmem:[%s1 + $0x118] sm:$0xff]
        %v269 = vld [vmem:[%s1 + $0x120] sm:$0xff]
        %v270 = vld [vmem:[%s1 + $0x128] sm:$0xff]
        %v271 = vld [vmem:[%s1 + $0x130] sm:$0xff]
        %v272 = vld [vmem:[%s1 + $0x138] sm:$0xff]
        %v273 = vld [vmem:[%s1 + $0x140] sm:$0xff]
        %v274 = vld [vmem:[%s1 + $0x148] sm:$0xff]
        %v275 = vld [vmem:[%s1 + $0x150] sm:$0xff]
        %v276 = vld [vmem:[%s1 + $0x158] sm:$0xff]
        %v277 = vld [vmem:[%s1 + $0x160] sm:$0xff]
        %v278 = vld [vmem:[%s1 + $0x168] sm:$0xff]
        %v279 = vld [vmem:[%s1 + $0x170] sm:$0xff]
        %v280 = vld [vmem:[%s1 + $0x178] sm:$0xff]
        %v281 = vld [vmem:[%s1 + $0x180] sm:$0xff]
        %v282 = vld [vmem:[%s1 + $0x188] sm:$0xff]
        %v283 = vld [vmem:[%s1 + $0x190] sm:$0xff]
        %v284 = vld [vmem:[%s1 + $0x198] sm:$0xff]
        %v285 = vld [vmem:[%s1 + $0x1a0] sm:$0xff]
        %v286 = vld [vmem:[%s1 + $0x1a8] sm:$0xff]
        %v287 = vld [vmem:[%s1 + $0x1b0] sm:$0xff]
        %v288 = vld [vmem:[%s1 + $0x1b8] sm:$0xff]
        %v289 = vld [vmem:[%s1 + $0x1c0] sm:$0xff]
        %v290 = vld [vmem:[%s1 + $0x1c8] sm:$0xff]
        %v291 = vld [vmem:[%s1 + $0x1d0] sm:$0xff]
        %v292 = vld [vmem:[%s1 + $0x1d8] sm:$0xff]
        %vm293 = vcmask 261120
        %v295 = vsel %vm293, %v202, 0
        %v298 = vsel %vm293, %v204, 0
        %v301 = vsel %vm293, %v206, 0
        %v304 = vsel %vm293, %v208, 0
        %v307 = vsel %vm293, %v210, 0
        %v310 = vsel %vm293, %v212, 0
        %v313 = vsel %vm293, %v214, 0
        %v316 = vsel %vm293, %v216, 0
        %v319 = vsel %vm293, %v218, 0
        %v322 = vsel %vm293, %v220, 0
        %v325 = vsel %vm293, %v222, 0
        %v328 = vsel %vm293, %v224, 0
        %v331 = vsel %vm293, %v226, 0
        %v334 = vsel %vm293, %v228, 0
        %v337 = vsel %vm293, %v230, 0
        %v340 = vsel %vm293, %v232, 0
        %342 = vmatprep.subr.mxu0 %v234
        %343 = vmatpush1.msra.mxu0 %v233
        %344 = vmatprep.subr.mxu0 %v237
        %345 = vmatpush1.msra.mxu0 %v236
        %346 = vmatprep.subr.mxu0 %v240
        %347 = vmatpush1.msra.mxu0 %v239
        %348 = vmatprep.subr.mxu0 %v243
        %349 = vmatpush1.msra.mxu0 %v242
        %350 = vmatprep.subr.mxu0 %v246
        %351 = vmatpush1.msra.mxu0 %v245
        %352 = vmatprep.subr.mxu0 %v249
        %353 = vmatpush1.msra.mxu0 %v248
        %354 = vmatprep.subr.mxu0 %v252
        %355 = vmatpush1.msra.mxu0 %v251
        %356 = vmatprep.subr.mxu0 %v255
        %357 = vmatpush1.msra.mxu0 %v254
        %358 = vmatprep.subr.mxu0 %v258
        %359 = vmatpush1.msra.mxu0 %v257
        %360 = vmatprep.subr.mxu0 %v261
        %361 = vmatpush1.msra.mxu0 %v260
        %362 = vmatprep.subr.mxu0 %v264
        %363 = vmatpush1.msra.mxu0 %v263
        %364 = vmatprep.subr.mxu0 %v267
        %365 = vmatpush1.msra.mxu0 %v266
        %366 = vmatprep.subr.mxu0 %v270
        %367 = vmatpush1.msra.mxu0 %v269
        %368 = vmatprep.subr.mxu0 %v273
        %369 = vmatpush1.msra.mxu0 %v272
        %370 = vmatprep.subr.mxu0 %v276
        %371 = vmatpush1.msra.mxu0 %v275
        %372 = vmatprep.subr.mxu0 %v279
        %373 = vmatpush1.msra.mxu0 %v278
        %374 = vmatprep.subr.mxu0 %v282
        %375 = vmatpush1.msra.mxu0 %v281
        %376 = vmatprep.subr.mxu0 %v285
        %377 = vmatpush1.msra.mxu0 %v284
        %378 = vmatprep.subr.mxu0 %v288
        %379 = vmatpush1.msra.mxu0 %v287
        %380 = vmatprep.subr.mxu0 %v291
        %381 = vmatpush1.msra.mxu0 %v290
        %382 = vmatprep.subr.mxu0 0.0
        %383 = vmatpush1.msra.mxu0 0.0
        %384 = vmatprep.subr.mxu0 0.0
        %385 = vmatpush1.msra.mxu0 0.0
        %386 = vmatprep.subr.mxu0 0.0
        %387 = vmatpush1.msra.mxu0 0.0
        %388 = vmatprep.subr.mxu0 0.0
        %389 = vmatpush1.msra.mxu0 0.0
        %390 = vmatprep.subr.mxu0 0.0
        %391 = vmatpush1.msra.mxu0 0.0
        %392 = vmatprep.subr.mxu0 0.0
        %393 = vmatpush1.msra.mxu0 0.0
        %394 = vmatprep.subr.mxu0 0.0
        %395 = vmatpush1.msra.mxu0 0.0
        %396 = vmatprep.subr.mxu0 0.0
        %397 = vmatpush1.msra.mxu0 0.0
        %398 = vmatprep.subr.mxu0 0.0
        %399 = vmatpush1.msra.mxu0 0.0
        %400 = vmatprep.subr.mxu0 0.0
        %401 = vmatpush1.msra.mxu0 0.0
        %402 = vmatprep.subr.mxu0 0.0
        %403 = vmatpush1.msra.mxu0 0.0
        %404 = vmatprep.subr.mxu0 0.0
        %405 = vmatpush1.msra.mxu0 0.0
        %406 = vmatprep.mubr.f32.mxu0 %v295
        %407 = vmatmul.mubr.f32.gmra.mrb[0].mxu0 %v201
        %v408 = vpop.f32.mrb[0].mxu0
        %v409 = vadd.f32 0.0, %v408
        %v410 = vpop.f32.mrb[0].mxu0
        %v411 = vadd.f32 0.0, %v410
        %412 = vmatprep.mubr.f32.mxu0 %v298
        %413 = vmatmul.mubr.f32.gmra.mrb[0].mxu0 %v203
        %v414 = vpop.f32.mrb[0].mxu0
        %v415 = vadd.f32 0.0, %v414
        %v416 = vpop.f32.mrb[0].mxu0
        %v417 = vadd.f32 0.0, %v416
        %418 = vmatprep.mubr.f32.mxu0 %v301
        %419 = vmatmul.mubr.f32.gmra.mrb[0].mxu0 %v205
        %v420 = vpop.f32.mrb[0].mxu0
        %v421 = vadd.f32 0.0, %v420
        %v422 = vpop.f32.mrb[0].mxu0
        %v423 = vadd.f32 0.0, %v422
        %424 = vmatprep.mubr.f32.mxu0 %v304
        %425 = vmatmul.mubr.f32.gmra.mrb[0].mxu0 %v207
        %v426 = vpop.f32.mrb[0].mxu0
        %v427 = vadd.f32 0.0, %v426
        %v428 = vpop.f32.mrb[0].mxu0
        %v429 = vadd.f32 0.0, %v428
        %430 = vmatprep.mubr.f32.mxu0 %v307
        %431 = vmatmul.mubr.f32.gmra.mrb[0].mxu0 %v209
        %v432 = vpop.f32.mrb[0].mxu0
        %v433 = vadd.f32 0.0, %v432
        %v434 = vpop.f32.mrb[0].mxu0
        %v435 = vadd.f32 0.0, %v434
        %436 = vmatprep.mubr.f32.mxu0 %v310
        %437 = vmatmul.mubr.f32.gmra.mrb[0].mxu0 %v211
        %v438 = vpop.f32.mrb[0].mxu0
        %v439 = vadd.f32 0.0, %v438
        %v440 = vpop.f32.mrb[0].mxu0
        %v441 = vadd.f32 0.0, %v440
        %442 = vmatprep.mubr.f32.mxu0 %v313
        %443 = vmatmul.mubr.f32.gmra.mrb[0].mxu0 %v213
        %v444 = vpop.f32.mrb[0].mxu0
        %v445 = vadd.f32 0.0, %v444
        %v446 = vpop.f32.mrb[0].mxu0
        %v447 = vadd.f32 0.0, %v446
        %448 = vmatprep.mubr.f32.mxu0 %v316
        %449 = vmatmul.mubr.f32.gmra.mrb[0].mxu0 %v215
        %v450 = vpop.f32.mrb[0].mxu0
        %v451 = vadd.f32 0.0, %v450
        %v452 = vpop.f32.mrb[0].mxu0
        %v453 = vadd.f32 0.0, %v452
        %454 = vmatprep.mubr.f32.mxu0 %v319
        %455 = vmatmul.mubr.f32.gmra.mrb[0].mxu0 %v217
        %v456 = vpop.f32.mrb[0].mxu0
        %v457 = vadd.f32 0.0, %v456
        %v458 = vpop.f32.mrb[0].mxu0
        %v459 = vadd.f32 0.0, %v458
        %460 = vmatprep.mubr.f32.mxu0 %v322
        %461 = vmatmul.mubr.f32.gmra.mrb[0].mxu0 %v219
        %v462 = vpop.f32.mrb[0].mxu0
        %v463 = vadd.f32 0.0, %v462
        %v464 = vpop.f32.mrb[0].mxu0
        %v465 = vadd.f32 0.0, %v464
        %466 = vmatprep.mubr.f32.mxu0 %v325
        %467 = vmatmul.mubr.f32.gmra.mrb[0].mxu0 %v221
        %v468 = vpop.f32.mrb[0].mxu0
        %v469 = vadd.f32 0.0, %v468
        %v470 = vpop.f32.mrb[0].mxu0
        %v471 = vadd.f32 0.0, %v470
        %472 = vmatprep.mubr.f32.mxu0 %v328
        %473 = vmatmul.mubr.f32.gmra.mrb[0].mxu0 %v223
        %v474 = vpop.f32.mrb[0].mxu0
        %v475 = vadd.f32 0.0, %v474
        %v476 = vpop.f32.mrb[0].mxu0
        %v477 = vadd.f32 0.0, %v476
        %478 = vmatprep.mubr.f32.mxu0 %v331
        %479 = vmatmul.mubr.f32.gmra.mrb[0].mxu0 %v225
        %v480 = vpop.f32.mrb[0].mxu0
        %v481 = vadd.f32 0.0, %v480
        %v482 = vpop.f32.mrb[0].mxu0
        %v483 = vadd.f32 0.0, %v482
        %484 = vmatprep.mubr.f32.mxu0 %v334
        %485 = vmatmul.mubr.f32.gmra.mrb[0].mxu0 %v227
        %v486 = vpop.f32.mrb[0].mxu0
        %v487 = vadd.f32 0.0, %v486
        %v488 = vpop.f32.mrb[0].mxu0
        %v489 = vadd.f32 0.0, %v488
        %490 = vmatprep.mubr.f32.mxu0 %v337
        %491 = vmatmul.mubr.f32.gmra.mrb[0].mxu0 %v229
        %v492 = vpop.f32.mrb[0].mxu0
        %v493 = vadd.f32 0.0, %v492
        %v494 = vpop.f32.mrb[0].mxu0
        %v495 = vadd.f32 0.0, %v494
        %496 = vmatprep.mubr.f32.mxu0 %v340
        %497 = vmatmul.mubr.f32.gmra.mrb[0].mxu0 %v231
        %v498 = vpop.f32.mrb[0].mxu0
        %v499 = vadd.f32 0.0, %v498
        %v500 = vpop.f32.mrb[0].mxu0
        %v501 = vadd.f32 0.0, %v500
        %502 = vdwg.mxu0
        %503 = vmatprep.subr.mxu0 0.0
        %504 = vmatpush1.msra.mxu0 %v235
        %505 = vmatprep.subr.mxu0 0.0
        %506 = vmatpush1.msra.mxu0 %v238
        %507 = vmatprep.subr.mxu0 0.0
        %508 = vmatpush1.msra.mxu0 %v241
        %509 = vmatprep.subr.mxu0 0.0
        %510 = vmatpush1.msra.mxu0 %v244
        %511 = vmatprep.subr.mxu0 0.0
        %512 = vmatpush1.msra.mxu0 %v247
        %513 = vmatprep.subr.mxu0 0.0
        %514 = vmatpush1.msra.mxu0 %v250
        %515 = vmatprep.subr.mxu0 0.0
        %516 = vmatpush1.msra.mxu0 %v253
        %517 = vmatprep.subr.mxu0 0.0
        %518 = vmatpush1.msra.mxu0 %v256
        %519 = vmatprep.subr.mxu0 0.0
        %520 = vmatpush1.msra.mxu0 %v259
        %521 = vmatprep.subr.mxu0 0.0
        %522 = vmatpush1.msra.mxu0 %v262
        %523 = vmatprep.subr.mxu0 0.0
        %524 = vmatpush1.msra.mxu0 %v265
        %525 = vmatprep.subr.mxu0 0.0
        %526 = vmatpush1.msra.mxu0 %v268
        %527 = vmatprep.subr.mxu0 0.0
        %528 = vmatpush1.msra.mxu0 %v271
        %529 = vmatprep.subr.mxu0 0.0
        %530 = vmatpush1.msra.mxu0 %v274
        %531 = vmatprep.subr.mxu0 0.0
        %532 = vmatpush1.msra.mxu0 %v277
        %533 = vmatprep.subr.mxu0 0.0
        %534 = vmatpush1.msra.mxu0 %v280
        %535 = vmatprep.subr.mxu0 0.0
        %536 = vmatpush1.msra.mxu0 %v283
        %537 = vmatprep.subr.mxu0 0.0
        %538 = vmatpush1.msra.mxu0 %v286
        %539 = vmatprep.subr.mxu0 0.0
        %540 = vmatpush1.msra.mxu0 %v289
        %541 = vmatprep.subr.mxu0 0.0
        %542 = vmatpush1.msra.mxu0 %v292
        %543 = vmatprep.subr.mxu0 0.0
        %544 = vmatpush1.msra.mxu0 0.0
        %545 = vmatprep.subr.mxu0 0.0
        %546 = vmatpush1.msra.mxu0 0.0
        %547 = vmatprep.subr.mxu0 0.0
        %548 = vmatpush1.msra.mxu0 0.0
        %549 = vmatprep.subr.mxu0 0.0
        %550 = vmatpush1.msra.mxu0 0.0
        %551 = vmatprep.subr.mxu0 0.0
        %552 = vmatpush1.msra.mxu0 0.0
        %553 = vmatprep.subr.mxu0 0.0
        %554 = vmatpush1.msra.mxu0 0.0
        %555 = vmatprep.subr.mxu0 0.0
        %556 = vmatpush1.msra.mxu0 0.0
        %557 = vmatprep.subr.mxu0 0.0
        %558 = vmatpush1.msra.mxu0 0.0
        %559 = vmatprep.subr.mxu0 0.0
        %560 = vmatpush1.msra.mxu0 0.0
        %561 = vmatprep.subr.mxu0 0.0
        %562 = vmatpush1.msra.mxu0 0.0
        %563 = vmatprep.subr.mxu0 0.0
        %564 = vmatpush1.msra.mxu0 0.0
        %565 = vmatprep.subr.mxu0 0.0
        %566 = vmatpush1.msra.mxu0 0.0
        %567 = vmatprep.mubr.f32.mxu0 %v295
        %568 = vmatmul.mubr.f32.gmra.mrb[0].mxu0 %v201
        %v569 = vpop.f32.mrb[0].mxu0
        %v570 = vadd.f32 0.0, %v569
        %v571 = vpop.f32.mrb[0].mxu0
        %572 = vmatprep.mubr.f32.mxu0 %v298
        %573 = vmatmul.mubr.f32.gmra.mrb[0].mxu0 %v203
        %v574 = vpop.f32.mrb[0].mxu0
        %v575 = vadd.f32 0.0, %v574
        %v576 = vpop.f32.mrb[0].mxu0
        %577 = vmatprep.mubr.f32.mxu0 %v301
        %578 = vmatmul.mubr.f32.gmra.mrb[0].mxu0 %v205
        %v579 = vpop.f32.mrb[0].mxu0
        %v580 = vadd.f32 0.0, %v579
        %v581 = vpop.f32.mrb[0].mxu0
        %582 = vmatprep.mubr.f32.mxu0 %v304
        %583 = vmatmul.mubr.f32.gmra.mrb[0].mxu0 %v207
        %v584 = vpop.f32.mrb[0].mxu0
        %v585 = vadd.f32 0.0, %v584
        %v586 = vpop.f32.mrb[0].mxu0
        %587 = vmatprep.mubr.f32.mxu0 %v307
        %588 = vmatmul.mubr.f32.gmra.mrb[0].mxu0 %v209
        %v589 = vpop.f32.mrb[0].mxu0
        %v590 = vadd.f32 0.0, %v589
        %v591 = vpop.f32.mrb[0].mxu0
        %592 = vmatprep.mubr.f32.mxu0 %v310
        %593 = vmatmul.mubr.f32.gmra.mrb[0].mxu0 %v211
        %v594 = vpop.f32.mrb[0].mxu0
        %v595 = vadd.f32 0.0, %v594
        %v596 = vpop.f32.mrb[0].mxu0
        %597 = vmatprep.mubr.f32.mxu0 %v313
        %598 = vmatmul.mubr.f32.gmra.mrb[0].mxu0 %v213
        %v599 = vpop.f32.mrb[0].mxu0
        %v600 = vadd.f32 0.0, %v599
        %v601 = vpop.f32.mrb[0].mxu0
        %602 = vmatprep.mubr.f32.mxu0 %v316
        %603 = vmatmul.mubr.f32.gmra.mrb[0].mxu0 %v215
        %v604 = vpop.f32.mrb[0].mxu0
        %v605 = vadd.f32 0.0, %v604
        %v606 = vpop.f32.mrb[0].mxu0
        %607 = vmatprep.mubr.f32.mxu0 %v319
        %608 = vmatmul.mubr.f32.gmra.mrb[0].mxu0 %v217
        %v609 = vpop.f32.mrb[0].mxu0
        %v610 = vadd.f32 0.0, %v609
        %v611 = vpop.f32.mrb[0].mxu0
        %612 = vmatprep.mubr.f32.mxu0 %v322
        %613 = vmatmul.mubr.f32.gmra.mrb[0].mxu0 %v219
        %v614 = vpop.f32.mrb[0].mxu0
        %v615 = vadd.f32 0.0, %v614
        %v616 = vpop.f32.mrb[0].mxu0
        %617 = vmatprep.mubr.f32.mxu0 %v325
        %618 = vmatmul.mubr.f32.gmra.mrb[0].mxu0 %v221
        %v619 = vpop.f32.mrb[0].mxu0
        %v620 = vadd.f32 0.0, %v619
        %v621 = vpop.f32.mrb[0].mxu0
        %622 = vmatprep.mubr.f32.mxu0 %v328
        %623 = vmatmul.mubr.f32.gmra.mrb[0].mxu0 %v223
        %v624 = vpop.f32.mrb[0].mxu0
        %v625 = vadd.f32 0.0, %v624
        %v626 = vpop.f32.mrb[0].mxu0
        %627 = vmatprep.mubr.f32.mxu0 %v331
        %628 = vmatmul.mubr.f32.gmra.mrb[0].mxu0 %v225
        %v629 = vpop.f32.mrb[0].mxu0
        %v630 = vadd.f32 0.0, %v629
        %v631 = vpop.f32.mrb[0].mxu0
        %632 = vmatprep.mubr.f32.mxu0 %v334
        %633 = vmatmul.mubr.f32.gmra.mrb[0].mxu0 %v227
        %v634 = vpop.f32.mrb[0].mxu0
        %v635 = vadd.f32 0.0, %v634
        %v636 = vpop.f32.mrb[0].mxu0
        %637 = vmatprep.mubr.f32.mxu0 %v337
        %638 = vmatmul.mubr.f32.gmra.mrb[0].mxu0 %v229
        %v639 = vpop.f32.mrb[0].mxu0
        %v640 = vadd.f32 0.0, %v639
        %v641 = vpop.f32.mrb[0].mxu0
        %642 = vmatprep.mubr.f32.mxu0 %v340
        %643 = vmatmul.mubr.f32.gmra.mrb[0].mxu0 %v231
        %v644 = vpop.f32.mrb[0].mxu0
        %v645 = vadd.f32 0.0, %v644
        %v646 = vpop.f32.mrb[0].mxu0
        %647 = vdwg.mxu0
        %v648 = vld [vmem:[%s3] sm:$0xff]
        %v649 = vld [vmem:[%s3 + $0x8] sm:$0xff]
        %v650 = vld [vmem:[%s3 + $0x10] sm:$0xff]
        %v651 = vld [vmem:[%s3 + $0x18] sm:$0xff]
        %v652 = vld [vmem:[%s3 + $0x20] sm:$0xff]
        %v653 = vld [vmem:[%s3 + $0x28] sm:$0xff]
        %v654 = vadd.f32 %v409, %v648
        %v655 = vadd.f32 %v411, %v649
        %v656 = vadd.f32 %v570, %v650
        %v657 = vadd.f32 %v415, %v651
        %v658 = vadd.f32 %v417, %v652
        %v659 = vadd.f32 %v575, %v653
        %v660 = vadd.f32 %v421, %v648
        %v661 = vadd.f32 %v423, %v649
        %v662 = vadd.f32 %v580, %v650
        %v663 = vadd.f32 %v427, %v651
        %v664 = vadd.f32 %v429, %v652
        %v665 = vadd.f32 %v585, %v653
        %v666 = vadd.f32 %v433, %v648
        %v667 = vadd.f32 %v435, %v649
        %v668 = vadd.f32 %v590, %v650
        %v669 = vadd.f32 %v439, %v651
        %v670 = vadd.f32 %v441, %v652
        %v671 = vadd.f32 %v595, %v653
        %v672 = vadd.f32 %v445, %v648
        %v673 = vadd.f32 %v447, %v649
        %v674 = vadd.f32 %v600, %v650
        %v675 = vadd.f32 %v451, %v651
        %v676 = vadd.f32 %v453, %v652
        %v677 = vadd.f32 %v605, %v653
        %v678 = vadd.f32 %v457, %v648
        %v679 = vadd.f32 %v459, %v649
        %v680 = vadd.f32 %v610, %v650
        %v681 = vadd.f32 %v463, %v651
        %v682 = vadd.f32 %v465, %v652
        %v683 = vadd.f32 %v615, %v653
        %v684 = vadd.f32 %v469, %v648
        %v685 = vadd.f32 %v471, %v649
        %v686 = vadd.f32 %v620, %v650
        %v687 = vadd.f32 %v475, %v651
        %v688 = vadd.f32 %v477, %v652
        %v689 = vadd.f32 %v625, %v653
        %v690 = vadd.f32 %v481, %v648
        %v691 = vadd.f32 %v483, %v649
        %v692 = vadd.f32 %v630, %v650
        %v693 = vadd.f32 %v487, %v651
        %v694 = vadd.f32 %v489, %v652
        %v695 = vadd.f32 %v635, %v653
        %v696 = vadd.f32 %v493, %v648
        %v697 = vadd.f32 %v495, %v649
        %v698 = vadd.f32 %v640, %v650
        %v699 = vadd.f32 %v499, %v651
        %v700 = vadd.f32 %v501, %v652
        %v701 = vadd.f32 %v645, %v653
        %v702 = vmax.f32 %v654, %v657
        %v703 = vrot.slane %v702, 4
        %v704 = vmax.f32 %v702, %v703
        %v705 = vrot.slane %v704, 2
        %v706 = vmax.f32 %v704, %v705
        %v707 = vrot.slane %v706, 1
        %v708 = vmax.f32 %v706, %v707
        %v709 = vmax.f32 %v655, %v658
        %v710 = vrot.slane %v709, 4
        %v711 = vmax.f32 %v709, %v710
        %v712 = vrot.slane %v711, 2
        %v713 = vmax.f32 %v711, %v712
        %v714 = vrot.slane %v713, 1
        %v715 = vmax.f32 %v713, %v714
        %v716 = vmax.f32 %v656, %v659
        %v717 = vrot.slane %v716, 4
        %v718 = vmax.f32 %v716, %v717
        %v719 = vrot.slane %v718, 2
        %v720 = vmax.f32 %v718, %v719
        %v721 = vrot.slane %v720, 1
        %v722 = vmax.f32 %v720, %v721
        %v723 = vmax.f32 %v660, %v663
        %v724 = vrot.slane %v723, 4
        %v725 = vmax.f32 %v723, %v724
        %v726 = vrot.slane %v725, 2
        %v727 = vmax.f32 %v725, %v726
        %v728 = vrot.slane %v727, 1
        %v729 = vmax.f32 %v727, %v728
        %v730 = vmax.f32 %v661, %v664
        %v731 = vrot.slane %v730, 4
        %v732 = vmax.f32 %v730, %v731
        %v733 = vrot.slane %v732, 2
        %v734 = vmax.f32 %v732, %v733
        %v735 = vrot.slane %v734, 1
        %v736 = vmax.f32 %v734, %v735
        %v737 = vmax.f32 %v662, %v665
        %v738 = vrot.slane %v737, 4
        %v739 = vmax.f32 %v737, %v738
        %v740 = vrot.slane %v739, 2
        %v741 = vmax.f32 %v739, %v740
        %v742 = vrot.slane %v741, 1
        %v743 = vmax.f32 %v741, %v742
        %v744 = vmax.f32 %v666, %v669
        %v745 = vrot.slane %v744, 4
        %v746 = vmax.f32 %v744, %v745
        %v747 = vrot.slane %v746, 2
        %v748 = vmax.f32 %v746, %v747
        %v749 = vrot.slane %v748, 1
        %v750 = vmax.f32 %v748, %v749
        %v751 = vmax.f32 %v667, %v670
        %v752 = vrot.slane %v751, 4
        %v753 = vmax.f32 %v751, %v752
        %v754 = vrot.slane %v753, 2
        %v755 = vmax.f32 %v753, %v754
        %v756 = vrot.slane %v755, 1
        %v757 = vmax.f32 %v755, %v756
        %v758 = vmax.f32 %v668, %v671
        %v759 = vrot.slane %v758, 4
        %v760 = vmax.f32 %v758, %v759
        %v761 = vrot.slane %v760, 2
        %v762 = vmax.f32 %v760, %v761
        %v763 = vrot.slane %v762, 1
        %v764 = vmax.f32 %v762, %v763
        %v765 = vmax.f32 %v672, %v675
        %v766 = vrot.slane %v765, 4
        %v767 = vmax.f32 %v765, %v766
        %v768 = vrot.slane %v767, 2
        %v769 = vmax.f32 %v767, %v768
        %v770 = vrot.slane %v769, 1
        %v771 = vmax.f32 %v769, %v770
        %v772 = vmax.f32 %v673, %v676
        %v773 = vrot.slane %v772, 4
        %v774 = vmax.f32 %v772, %v773
        %v775 = vrot.slane %v774, 2
        %v776 = vmax.f32 %v774, %v775
        %v777 = vrot.slane %v776, 1
        %v778 = vmax.f32 %v776, %v777
        %v779 = vmax.f32 %v674, %v677
        %v780 = vrot.slane %v779, 4
        %v781 = vmax.f32 %v779, %v780
        %v782 = vrot.slane %v781, 2
        %v783 = vmax.f32 %v781, %v782
        %v784 = vrot.slane %v783, 1
        %v785 = vmax.f32 %v783, %v784
        %v786 = vmax.f32 %v678, %v681
        %v787 = vrot.slane %v786, 4
        %v788 = vmax.f32 %v786, %v787
        %v789 = vrot.slane %v788, 2
        %v790 = vmax.f32 %v788, %v789
        %v791 = vrot.slane %v790, 1
        %v792 = vmax.f32 %v790, %v791
        %v793 = vmax.f32 %v679, %v682
        %v794 = vrot.slane %v793, 4
        %v795 = vmax.f32 %v793, %v794
        %v796 = vrot.slane %v795, 2
        %v797 = vmax.f32 %v795, %v796
        %v798 = vrot.slane %v797, 1
        %v799 = vmax.f32 %v797, %v798
        %v800 = vmax.f32 %v680, %v683
        %v801 = vrot.slane %v800, 4
        %v802 = vmax.f32 %v800, %v801
        %v803 = vrot.slane %v802, 2
        %v804 = vmax.f32 %v802, %v803
        %v805 = vrot.slane %v804, 1
        %v806 = vmax.f32 %v804, %v805
        %v807 = vmax.f32 %v684, %v687
        %v808 = vrot.slane %v807, 4
        %v809 = vmax.f32 %v807, %v808
        %v810 = vrot.slane %v809, 2
        %v811 = vmax.f32 %v809, %v810
        %v812 = vrot.slane %v811, 1
        %v813 = vmax.f32 %v811, %v812
        %v814 = vmax.f32 %v685, %v688
        %v815 = vrot.slane %v814, 4
        %v816 = vmax.f32 %v814, %v815
        %v817 = vrot.slane %v816, 2
        %v818 = vmax.f32 %v816, %v817
        %v819 = vrot.slane %v818, 1
        %v820 = vmax.f32 %v818, %v819
        %v821 = vmax.f32 %v686, %v689
        %v822 = vrot.slane %v821, 4
        %v823 = vmax.f32 %v821, %v822
        %v824 = vrot.slane %v823, 2
        %v825 = vmax.f32 %v823, %v824
        %v826 = vrot.slane %v825, 1
        %v827 = vmax.f32 %v825, %v826
        %v828 = vmax.f32 %v690, %v693
        %v829 = vrot.slane %v828, 4
        %v830 = vmax.f32 %v828, %v829
        %v831 = vrot.slane %v830, 2
        %v832 = vmax.f32 %v830, %v831
        %v833 = vrot.slane %v832, 1
        %v834 = vmax.f32 %v832, %v833
        %v835 = vmax.f32 %v691, %v694
        %v836 = vrot.slane %v835, 4
        %v837 = vmax.f32 %v835, %v836
        %v838 = vrot.slane %v837, 2
        %v839 = vmax.f32 %v837, %v838
        %v840 = vrot.slane %v839, 1
        %v841 = vmax.f32 %v839, %v840
        %v842 = vmax.f32 %v692, %v695
        %v843 = vrot.slane %v842, 4
        %v844 = vmax.f32 %v842, %v843
        %v845 = vrot.slane %v844, 2
        %v846 = vmax.f32 %v844, %v845
        %v847 = vrot.slane %v846, 1
        %v848 = vmax.f32 %v846, %v847
        %v849 = vmax.f32 %v696, %v699
        %v850 = vrot.slane %v849, 4
        %v851 = vmax.f32 %v849, %v850
        %v852 = vrot.slane %v851, 2
        %v853 = vmax.f32 %v851, %v852
        %v854 = vrot.slane %v853, 1
        %v855 = vmax.f32 %v853, %v854
        %v856 = vmax.f32 %v697, %v700
        %v857 = vrot.slane %v856, 4
        %v858 = vmax.f32 %v856, %v857
        %v859 = vrot.slane %v858, 2
        %v860 = vmax.f32 %v858, %v859
        %v861 = vrot.slane %v860, 1
        %v862 = vmax.f32 %v860, %v861
        %v863 = vmax.f32 %v698, %v701
        %v864 = vrot.slane %v863, 4
        %v865 = vmax.f32 %v863, %v864
        %v866 = vrot.slane %v865, 2
        %v867 = vmax.f32 %v865, %v866
        %v868 = vrot.slane %v867, 1
        %v869 = vmax.f32 %v867, %v868
        %v870 = vld [vmem:[%s2] sm:$0x7]
        %v872 = vlaneseq
        %v873 = vshrl.u32 %v872, 7
        %v874 = vsub.s32 0, %v873
        %v875 = vrot.slane %v870, %v874
        %v876 = vlaneseq
        %v877 = vshrl.u32 %v876, 7
        %v878 = vsub.s32 1, %v877
        %v879 = vrot.slane %v870, %v878
        %v880 = vlaneseq
        %v881 = vshrl.u32 %v880, 7
        %v882 = vsub.s32 2, %v881
        %v883 = vrot.slane %v870, %v882
        %v887 = vadd.f32 %v708, %v875
        %v888 = vadd.f32 %v715, %v879
        %v889 = vadd.f32 %v722, %v883
        %v890 = vadd.f32 %v729, %v875
        %v891 = vadd.f32 %v736, %v879
        %v892 = vadd.f32 %v743, %v883
        %v893 = vadd.f32 %v750, %v875
        %v894 = vadd.f32 %v757, %v879
        %v895 = vadd.f32 %v764, %v883
        %v896 = vadd.f32 %v771, %v875
        %v897 = vadd.f32 %v778, %v879
        %v898 = vadd.f32 %v785, %v883
        %v899 = vadd.f32 %v792, %v875
        %v900 = vadd.f32 %v799, %v879
        %v901 = vadd.f32 %v806, %v883
        %v902 = vadd.f32 %v813, %v875
        %v903 = vadd.f32 %v820, %v879
        %v904 = vadd.f32 %v827, %v883
        %v905 = vadd.f32 %v834, %v875
        %v906 = vadd.f32 %v841, %v879
        %v907 = vadd.f32 %v848, %v883
        %v908 = vadd.f32 %v855, %v875
        %v909 = vadd.f32 %v862, %v879
        %v910 = vadd.f32 %v869, %v883
        %v935 = vrot.slane %v890, 7
        %vm936 = vcmask 1041409
        %v937 = vsel %vm936, %v935, %v887
        %v938 = vrot.slane %v893, 6
        %vm939 = vcmask 1042434
        %v940 = vsel %vm939, %v938, %v937
        %v941 = vrot.slane %v896, 5
        %vm942 = vcmask 1043459
        %v943 = vsel %vm942, %v941, %v940
        %v944 = vrot.slane %v899, 4
        %vm945 = vcmask 1044484
        %v946 = vsel %vm945, %v944, %v943
        %v947 = vrot.slane %v902, 3
        %vm948 = vcmask 1045509
        %v949 = vsel %vm948, %v947, %v946
        %v950 = vrot.slane %v905, 2
        %vm951 = vcmask 1046534
        %v952 = vsel %vm951, %v950, %v949
        %v953 = vrot.slane %v908, 1
        %vm954 = vcmask 1047559
        %v955 = vsel %vm954, %v953, %v952
        %v956 = vrot.slane %v891, 7
        %v957 = vsel %vm936, %v956, %v888
        %v958 = vrot.slane %v894, 6
        %v959 = vsel %vm939, %v958, %v957
        %v960 = vrot.slane %v897, 5
        %v961 = vsel %vm942, %v960, %v959
        %v962 = vrot.slane %v900, 4
        %v963 = vsel %vm945, %v962, %v961
        %v964 = vrot.slane %v903, 3
        %v965 = vsel %vm948, %v964, %v963
        %v966 = vrot.slane %v906, 2
        %v967 = vsel %vm951, %v966, %v965
        %v968 = vrot.slane %v909, 1
        %v969 = vsel %vm954, %v968, %v967
        %v970 = vrot.slane %v892, 7
        %v971 = vsel %vm936, %v970, %v889
        %v972 = vrot.slane %v895, 6
        %v973 = vsel %vm939, %v972, %v971
        %v974 = vrot.slane %v898, 5
        %v975 = vsel %vm942, %v974, %v973
        %v976 = vrot.slane %v901, 4
        %v977 = vsel %vm945, %v976, %v975
        %v978 = vrot.slane %v904, 3
        %v979 = vsel %vm948, %v978, %v977
        %v980 = vrot.slane %v907, 2
        %v981 = vsel %vm951, %v980, %v979
        %v982 = vrot.slane %v910, 1
        %v983 = vsel %vm954, %v982, %v981
        %987 = vst [vmem:[%s193] sm:$0xff] %v955
        %988 = vst [vmem:[%s193 + $0x8] sm:$0xff] %v969
        %989 = vst [vmem:[%s193 + $0x10] sm:$0xff] %v983
        %s990 = sand.u32 %s115, 1
        %s991 = scalar_lea.sflag [#allocation3], %s990
        %s992 = sand.u32 %s115, 1
        %s993 = smul.addr %s992, 24
        %s994 = scalar_lea.vmem [#allocation2], %s993
        // Predicated region
        $region37: #{tpu_custom_call.1} parent=35 // pred_check
          %p995 = pneg %p125
        $region38: #{tpu_custom_call.1} parent=35 // pred_check_branch
          %997 = sbr.rel (%p995) target = $region40
        $region39: #{tpu_custom_call.1} parent=35 // pred_region
          %s999 = ssub.s32 384, 384
          %1000 = vsyncadd %s991, %s999
          %s1001 = smul.addr %s18, 3
          %s1002 = smul.addr %s1001, 128
          %s1003 = scalar_lea.hbm %s4, %s1002
          %s1005 = sshll.u32 %s994, 4
          %s1006 = int_to_ptr.vmem [resolvable:$true] %s1005
          %1008 = dma.vmem_to_hbm [thread:$0]  %s1006, 384, %s1003, %s991
        $region40: #{tpu_custom_call.1} parent=35 // pred_fallthru
          _
      $region36: #{tpu_custom_call.1} parent=5 // pred_fallthru
        _
      %p1009 = scmp.le.s32.totalorder 2, %s13
      // Predicated region
      $region41: #{tpu_custom_call.1} parent=5 // pred_check
        %p1010 = pneg %p1009
      $region42: #{tpu_custom_call.1} parent=5 // pred_check_branch
        %1012 = sbr.rel (%p1010) target = $region44
      $region43: #{tpu_custom_call.1} parent=5 // pred_region
        %s1013 = ssub.s32 %s13, 2
        // Predicated region
        $region45: #{tpu_custom_call.1} parent=43 // pred_check
          %p1014 = pneg %p131
        $region46: #{tpu_custom_call.1} parent=43 // pred_check_branch
          %1016 = sbr.rel (%p1014) target = $region48
        $region47: #{tpu_custom_call.1} parent=43 // pred_region
          %s1017 = sand.u32 %s116, 1
          %s1018 = scalar_lea.sflag [#allocation3], %s1017
          %s1019 = sand.u32 %s116, 1
          %s1020 = smul.addr %s1019, 24
          %s1021 = scalar_lea.vmem [#allocation2], %s1020
          %1022 = dma.done %s1018, 384
        $region48: #{tpu_custom_call.1} parent=43 // pred_fallthru
          _
      $region44: #{tpu_custom_call.1} parent=5 // pred_fallthru
        _
    $region6: #{tpu_custom_call.1} parent=1 // loop_footer
      %s17 = sadd.s32 1, %s13
    $region7: #{tpu_custom_call.1} parent=1 // loop_footer_branch
      %12 = sbr.rel target = $region3
    $region8: #{tpu_custom_call.1} parent=1 // loop_exit
      _
    %1023 = vsyncpa [#allocation3], 1
    %s1024 = scalar_lea.sflag [#allocation3], 1
    %1025 = vsyncpa %s1024, 1

</llo_original>
